<compile_context>
chip_gen: v7x
topology: tpu7x:2x2x1
jax: 0.10.0
libtpu: 0.0.40
codegen_flags: <defaults>
</compile_context>

<pallas_src>
import functools

import jax
import jax.numpy as jnp
from jax import lax
from jax.experimental import pallas as pl
from jax.experimental.pallas import tpu as pltpu


def _round_up(n, m):
    return ((n + m - 1) // m) * m


def _auto_block_rows(batch, feat, itemsize, *, target_tile_bytes=8 << 20,
                     vmem_budget_bytes=24 << 20, max_rows=16384):
    """Pick the batch-tile height TB from the feature width.

    One (TB, feat) tile ~8 MiB amortizes the per-grid-step overhead; the
    double-buffered tile must stay inside a budget that is safe on every
    generation (v7x: 64 MiB/TC physical; v5e: 16 MiB default scoped limit,
    raised explicitly via vmem_limit_bytes).  TB is a multiple of 128 so the
    lane-dense output row gets unmasked full-width stores.
    """
    row_bytes = feat * itemsize
    tb = target_tile_bytes // row_bytes
    tb = min(tb, (vmem_budget_bytes // 2) // row_bytes, max_rows,
             _round_up(batch, 128))
    if tb >= 128:
        tb = (tb // 128) * 128
    else:
        # Pathologically wide feature dim: sublane granularity fallback.
        # TODO(synk): add a K grid axis + f32 VMEM accumulator for huge feat.
        tb = max(8, (tb // 8) * 8)
    return int(tb)


def _pick_chunk(tb, chunk_rows):
    """Largest multiple of 128 <= chunk_rows that divides TB (bounds vregs)."""
    if tb <= chunk_rows:
        return tb
    ch = (min(chunk_rows, tb) // 128) * 128
    while ch > 128 and tb % ch:
        ch -= 128
    return ch if tb % ch == 0 else tb


def _svm_kernel(x_ref, w_ref, b_ref, o_ref, *, n_chunks, chunk):
    # x_ref: (TB, D) VMEM (double-buffered stream)
    # w_ref: (1, D)  VMEM (resident)
    # b_ref: (1,)    SMEM scalar
    # o_ref: (1, TB) VMEM -- batch on the lane axis (lane-dense stores)
    w = w_ref[...]                                        # hoisted out of loop
    bias = jnp.full((1, chunk), b_ref[0], jnp.float32)    # hoisted broadcast

    def body(c, carry):
        start = pl.multiple_of(c * chunk, chunk)
        xc = x_ref[pl.ds(start, chunk), :]                # (chunk, D)
        # w(1,D) . x(chunk,D)^T -> (1, chunk): lane-dense row directly.
        row = lax.dot_general(
            w, xc,
            dimension_numbers=(((1,), (1,)), ((), ())),
            preferred_element_type=jnp.float32,
        )
        o_ref[:, pl.ds(start, chunk)] = (row + bias).astype(o_ref.dtype)
        return carry

    lax.fori_loop(0, n_chunks, body, 0, unroll=True)


def svm_forward(x, w, b, *, block_b=None, chunk_rows=1024):
    """SVM forward == nn.Linear(input_dim, 1):  out = x @ w.T + b.

    x: (B, D) float32
    w: (1, D) float32   (nn.Linear weight layout: (out_features=1, in_features))
    b: (1,)   float32
    returns: (B, 1) float32
    """
    B, D = x.shape
    assert w.shape == (1, D)
    b = jnp.asarray(b).reshape((1,)).astype(jnp.float32)
    itemsize = x.dtype.itemsize

    if block_b is None:
        TB = _auto_block_rows(B, D, itemsize)
    else:
        TB = max(8, min(block_b, _round_up(B, 128)))
        TB = (TB // 128) * 128 if TB >= 128 else max(8, (TB // 8) * 8)

    # No host-side padding: ragged last tile's out-of-range rows only affect
    # output lanes that are sliced off below.
    G = pl.cdiv(B, TB)
    CH = _pick_chunk(TB, chunk_rows)
    n_chunks = TB // CH

    # Explicit VMEM limit: double-buffered x tile + weight + output rows
    # + headroom (needed on v5e's 16 MiB default; well under v7x's 64 MiB/TC).
    vmem_limit = 2 * TB * D * itemsize + 2 * D * itemsize + 2 * TB * 4
    vmem_limit = int(min(max(vmem_limit + (4 << 20), 16 << 20), 32 << 20))

    kernel = functools.partial(_svm_kernel, n_chunks=n_chunks, chunk=CH)

    out_rows = pl.pallas_call(
        kernel,
        out_shape=jax.ShapeDtypeStruct((G, 1, TB), jnp.float32),
        grid=(G,),
        in_specs=[
            pl.BlockSpec((TB, D), lambda i: (i, 0)),             # activations
            pl.BlockSpec((1, D), lambda i: (0, 0)),              # weight (resident)
            pl.BlockSpec(memory_space=pltpu.MemorySpace.SMEM),   # bias scalar
        ],
        out_specs=pl.BlockSpec((None, 1, TB), lambda i: (i, 0, 0)),
        compiler_params=pltpu.CompilerParams(
            dimension_semantics=("parallel",),
            vmem_limit_bytes=vmem_limit,
        ),
        cost_estimate=pl.CostEstimate(
            flops=2 * B * D,
            bytes_accessed=itemsize * (B * D + D + B) + 4,
            transcendentals=0,
        ),
    )(x, w, b)

    # (G, 1, TB) -> (G*TB,) -> strip ragged tail -> (B, 1)
    return out_rows.reshape(G * TB)[:B].reshape(B, 1)


if __name__ == "__main__":
    key = jax.random.PRNGKey(0)
    k_x, k_w, k_b = jax.random.split(key, 3)

    # Ragged batch + non-128 feature dim: exercises the no-pad ragged tile path.
    batch, input_dim = 300, 160

    # nn.Linear(input_dim, 1) parameter shapes: weight (1, D), bias (1,).
    bound = 1.0 / (input_dim ** 0.5)
    w = jax.random.uniform(k_w, (1, input_dim), jnp.float32, -bound, bound)
    b = jax.random.uniform(k_b, (1,), jnp.float32, -bound, bound)
    x = jax.random.normal(k_x, (batch, input_dim), jnp.float32)

    ref = x @ w.T + b

    # 1) Auto-sized tile (production path; single tile at this small size).
    out_auto = jax.block_until_ready(svm_forward(x, w, b))
    # 2) Forced small tiles: multi-step grid + ragged last block + in-kernel
    #    chunk loop all exercised at this small size.
    out_small = jax.block_until_ready(
        svm_forward(x, w, b, block_b=256, chunk_rows=128))

    for out in (out_auto, out_small):
        assert out.shape == (batch, 1)
        assert jnp.allclose(out, ref, atol=1e-5, rtol=1e-5)

    print("KERNEL_OK")
</pallas_src>

<mosaic_0001>
module attributes {stable_mosaic.version = 11 : i64} {
  func.func @_svm_kernel(%arg0: i32, %arg1: memref<384x160xf32, #tpu.memory_space<vmem>>, %arg2: memref<1x160xf32, #tpu.memory_space<vmem>>, %arg3: memref<1xf32, #tpu.memory_space<smem>>, %arg4: memref<1x1x384xf32, #tpu.memory_space<vmem>>) attributes {dimension_semantics = [#tpu.dimension_semantics<parallel>], iteration_bounds = array<i64: 1>, scalar_prefetch = 0 : i64, scratch_operands = 0 : i64, tpu.core_type = #tpu.core_type<tc>, window_params = [{transform_indices = @transform_0, window_bounds = array<i64: 384, 160>}, {pipeline_mode = #tpu.pipeline_mode<synchronous>, transform_indices = @transform_1, window_bounds = array<i64: 1, 160>}, {transform_indices = @transform_2, window_bounds = array<i64: 1>}, {transform_indices = @transform_3, window_bounds = array<i64: 1, 1, 384>}]} {
    %c0 = arith.constant 0 : index
    %c0_0 = arith.constant 0 : index
    %0 = vector.load %arg2[%c0, %c0_0] : memref<1x160xf32, #tpu.memory_space<vmem>>, vector<1x160xf32>
    %c0_1 = arith.constant 0 : index
    %1 = memref.load %arg3[%c0_1] : memref<1xf32, #tpu.memory_space<smem>>
    %2 = vector.broadcast %1 : f32 to vector<1x384xf32>
    %c0_i32 = arith.constant 0 : i32
    %c384_i32 = arith.constant 384 : i32
    %3 = arith.muli %c0_i32, %c384_i32 : i32
    %4 = tpu.assume_multiple %3, 384 : i32
    %5 = arith.index_cast %4 : i32 to index
    %c0_2 = arith.constant 0 : index
    %6 = vector.load %arg1[%5, %c0_2] : memref<384x160xf32, #tpu.memory_space<vmem>>, vector<384x160xf32>
    %cst = arith.constant dense<0.000000e+00> : vector<1x384xf32>
    %7 = tpu.matmul %0, %6, %cst {dimension_numbers = #tpu.dot_dimension_numbers<[1], [1], [0], [0], [0, 0, 1, 0], [], []>} : vector<1x160xf32>, vector<384x160xf32>, vector<1x384xf32> -> vector<1x384xf32>
    %8 = arith.addf %7, %2 : vector<1x384xf32>
    %c0_3 = arith.constant 0 : index
    %c0_4 = arith.constant 0 : index
    %9 = arith.index_cast %4 : i32 to index
    %10 = vector.load %arg4[%c0_3, %c0_4, %9] : memref<1x1x384xf32, #tpu.memory_space<vmem>>, vector<1x1x384xf32>
    %11 = vector.shape_cast %10 : vector<1x1x384xf32> to vector<1x384xf32>
    %12 = vector.shape_cast %8 : vector<1x384xf32> to vector<1x1x384xf32>
    tpu.vector_store %arg4[%c0_3, %c0_4, %9], %12 {strides = array<i32>} : memref<1x1x384xf32, #tpu.memory_space<vmem>>, vector<1x1x384xf32>,
    %c1_i32 = arith.constant 1 : i32
    return
  }
  func.func @transform_0(%arg0: i32) -> (i32, i32) {
    %c0_i32 = arith.constant 0 : i32
    %c0_i32_0 = arith.constant 0 : i32
    return %arg0, %c0_i32 : i32, i32
  }
  func.func @transform_1(%arg0: i32) -> (i32, i32) {
    %c0_i32 = arith.constant 0 : i32
    %c0_i32_0 = arith.constant 0 : i32
    %c0_i32_1 = arith.constant 0 : i32
    return %c0_i32, %c0_i32_0 : i32, i32
  }
  func.func @transform_2(%arg0: i32) -> i32 {
    %c0_i32 = arith.constant 0 : i32
    %c0_i32_0 = arith.constant 0 : i32
    return %c0_i32 : i32
  }
  func.func @transform_3(%arg0: i32) -> (i32, i32, i32) {
    %c0_i32 = arith.constant 0 : i32
    %c0_i32_0 = arith.constant 0 : i32
    %c0_i32_1 = arith.constant 0 : i32
    return %arg0, %c0_i32, %c0_i32_0 : i32, i32, i32
  }
}

</mosaic_0001>

<llo_original>
// kernel: tpu_custom_call.1
$region0: #{tpu_custom_call.1}
  #allocation0 [shape = 'u32[]', space=smem, size = 0x4, offset = 0x4, fixed_abs, tag = 'smem constant byte address 0x4 - core index']
  #allocation1 [shape = 'u32[144,128]{1,0:T(1,128)}', space=vmem, size = 0x12000, scoped, tag = 'internal scratch']
  #allocation2 [shape = 'f32[1]{0:T(128)S(6)}', space=smem, size = 0x200, scoped, tag = 'scoped memory for tpu_custom_call.1']
  %s0 = inlined_call_operand.vmem [shape: f32[300,160], index: 0, kind: input, shape index: {}]
  %s1 = inlined_call_operand.vmem [shape: f32[1,160], index: 1, kind: input, shape index: {}]
  %s2 = inlined_call_operand.<no memory space> [shape: f32[1], index: 2, kind: input, shape index: {}]
  %s3 = inlined_call_operand.hbm [shape: f32[1,1,384], index: 3, kind: output, shape index: {}]
  %s4 = sld [smem:[#allocation0]]
  $region22: #{tpu_custom_call.1} parent=0
    _
  %s6 = ssub.s32 1, %s4
  %s7 = scalar_select 0, %s6, %s4
  %8 = sst [smem:[#allocation2]] %s2
  $region1: #{tpu_custom_call.1} parent=0
    #allocation3 [shape = 'u8[1536]{0}', space=vmem, size = 0x800, scoped, tag = 'output window, operand 0, single buffered']
    #allocation4 [shape = 's32[1]{0}', space=sflag, size = 0x4, scoped, tag = 'scoped memory for tpu_custom_call.1']
    %9 = vsyncpa [#allocation4], 0
    // Predicated region
    $region2: #{tpu_custom_call.1} parent=1 // pred_check
      _
    $region3: #{tpu_custom_call.1} parent=1 // pred_check_branch
      %11 = sbr.rel (0) target = $region5
    $region4: #{tpu_custom_call.1} parent=1 // pred_region
      _
    $region5: #{tpu_custom_call.1} parent=1 // pred_fallthru
      _
    // Predicated region
    $region6: #{tpu_custom_call.1} parent=1 // pred_check
      _
    $region7: #{tpu_custom_call.1} parent=1 // pred_check_branch
      %13 = sbr.rel (0) target = $region9
    $region8: #{tpu_custom_call.1} parent=1 // pred_region
      _
    $region9: #{tpu_custom_call.1} parent=1 // pred_fallthru
      _
    // Predicated region
    $region10: #{tpu_custom_call.1} parent=1 // pred_check
      _
    $region11: #{tpu_custom_call.1} parent=1 // pred_check_branch
      %15 = sbr.rel (0) target = $region13
    $region12: #{tpu_custom_call.1} parent=1 // pred_region
      _
    $region13: #{tpu_custom_call.1} parent=1 // pred_fallthru
      _
    %v16 = vld [vmem:[%s1] sm:$0x3]
    %s17 = sld [smem:[#allocation2]]
    %v18 = vstv %s17
    %s19 = smul.u32 0, 2
    %s20 = smul.addr %s19, 8
    %s21 = scalar_lea.vmem %s0, %s20
    %v22 = vld [vmem:[%s21] sm:$0xff]
    %v23 = vld [vmem:[%s21 + $0x8] sm:$0xff]
    %v24 = vld [vmem:[%s21 + $0x10] sm:$0xff]
    %v25 = vld [vmem:[%s21 + $0x18] sm:$0xff]
    %v26 = vld [vmem:[%s21 + $0x20] sm:$0xff]
    %v27 = vld [vmem:[%s21 + $0x28] sm:$0xff]
    %v28 = vld [vmem:[%s21 + $0x30] sm:$0xff]
    %v29 = vld [vmem:[%s21 + $0x38] sm:$0xff]
    %v30 = vld [vmem:[%s21 + $0x40] sm:$0xff]
    %v31 = vld [vmem:[%s21 + $0x48] sm:$0xff]
    %v32 = vld [vmem:[%s21 + $0x50] sm:$0xff]
    %v33 = vld [vmem:[%s21 + $0x58] sm:$0xff]
    %v34 = vld [vmem:[%s21 + $0x60] sm:$0xff]
    %v35 = vld [vmem:[%s21 + $0x68] sm:$0xff]
    %v36 = vld [vmem:[%s21 + $0x70] sm:$0xff]
    %v37 = vld [vmem:[%s21 + $0x78] sm:$0xff]
    %v38 = vld [vmem:[%s21 + $0x80] sm:$0xff]
    %v39 = vld [vmem:[%s21 + $0x88] sm:$0xff]
    %v40 = vld [vmem:[%s21 + $0x90] sm:$0xff]
    %v41 = vld [vmem:[%s21 + $0x98] sm:$0xff]
    %v42 = vld [vmem:[%s21 + $0xa0] sm:$0xff]
    %v43 = vld [vmem:[%s21 + $0xa8] sm:$0xff]
    %v44 = vld [vmem:[%s21 + $0xb0] sm:$0xff]
    %v45 = vld [vmem:[%s21 + $0xb8] sm:$0xff]
    %v46 = vld [vmem:[%s21 + $0xc0] sm:$0xff]
    %v47 = vld [vmem:[%s21 + $0xc8] sm:$0xff]
    %v48 = vld [vmem:[%s21 + $0xd0] sm:$0xff]
    %v49 = vld [vmem:[%s21 + $0xd8] sm:$0xff]
    %v50 = vld [vmem:[%s21 + $0xe0] sm:$0xff]
    %v51 = vld [vmem:[%s21 + $0xe8] sm:$0xff]
    %v52 = vld [vmem:[%s21 + $0xf0] sm:$0xff]
    %v53 = vld [vmem:[%s21 + $0xf8] sm:$0xff]
    %v54 = vld [vmem:[%s21 + $0x100] sm:$0xff]
    %v55 = vld [vmem:[%s21 + $0x108] sm:$0xff]
    %v56 = vld [vmem:[%s21 + $0x110] sm:$0xff]
    %v57 = vld [vmem:[%s21 + $0x118] sm:$0xff]
    %v58 = vld [vmem:[%s21 + $0x120] sm:$0xff]
    %v59 = vld [vmem:[%s21 + $0x128] sm:$0xff]
    %v60 = vld [vmem:[%s21 + $0x130] sm:$0xff]
    %v61 = vld [vmem:[%s21 + $0x138] sm:$0xff]
    %v62 = vld [vmem:[%s21 + $0x140] sm:$0xff]
    %v63 = vld [vmem:[%s21 + $0x148] sm:$0xff]
    %v64 = vld [vmem:[%s21 + $0x150] sm:$0xff]
    %v65 = vld [vmem:[%s21 + $0x158] sm:$0xff]
    %v66 = vld [vmem:[%s21 + $0x160] sm:$0xff]
    %v67 = vld [vmem:[%s21 + $0x168] sm:$0xff]
    %v68 = vld [vmem:[%s21 + $0x170] sm:$0xff]
    %v69 = vld [vmem:[%s21 + $0x178] sm:$0xff]
    %v70 = vld [vmem:[%s21 + $0x180] sm:$0xff]
    %v71 = vld [vmem:[%s21 + $0x188] sm:$0xff]
    %v72 = vld [vmem:[%s21 + $0x190] sm:$0xff]
    %v73 = vld [vmem:[%s21 + $0x198] sm:$0xff]
    %v74 = vld [vmem:[%s21 + $0x1a0] sm:$0xff]
    %v75 = vld [vmem:[%s21 + $0x1a8] sm:$0xff]
    %v76 = vld [vmem:[%s21 + $0x1b0] sm:$0xff]
    %v77 = vld [vmem:[%s21 + $0x1b8] sm:$0xff]
    %v78 = vld [vmem:[%s21 + $0x1c0] sm:$0xff]
    %v79 = vld [vmem:[%s21 + $0x1c8] sm:$0xff]
    %v80 = vld [vmem:[%s21 + $0x1d0] sm:$0xff]
    %v81 = vld [vmem:[%s21 + $0x1d8] sm:$0xff]
    %v82 = vld [vmem:[%s21 + $0x1e0] sm:$0xff]
    %v83 = vld [vmem:[%s21 + $0x1e8] sm:$0xff]
    %v84 = vld [vmem:[%s21 + $0x1f0] sm:$0xff]
    %v85 = vld [vmem:[%s21 + $0x1f8] sm:$0xff]
    %v86 = vld [vmem:[%s21 + $0x200] sm:$0xff]
    %v87 = vld [vmem:[%s21 + $0x208] sm:$0xff]
    %v88 = vld [vmem:[%s21 + $0x210] sm:$0xff]
    %v89 = vld [vmem:[%s21 + $0x218] sm:$0xff]
    %v90 = vld [vmem:[%s21 + $0x220] sm:$0xff]
    %v91 = vld [vmem:[%s21 + $0x228] sm:$0xff]
    %v92 = vld [vmem:[%s21 + $0x230] sm:$0xff]
    %v93 = vld [vmem:[%s21 + $0x238] sm:$0xff]
    %v94 = vld [vmem:[%s21 + $0x240] sm:$0xff]
    %v95 = vld [vmem:[%s21 + $0x248] sm:$0xff]
    %v96 = vld [vmem:[%s21 + $0x250] sm:$0xff]
    %v97 = vld [vmem:[%s21 + $0x258] sm:$0xff]
    %v98 = vld [vmem:[%s21 + $0x260] sm:$0xff]
    %v99 = vld [vmem:[%s21 + $0x268] sm:$0xff]
    %v100 = vld [vmem:[%s21 + $0x270] sm:$0xff]
    %v101 = vld [vmem:[%s21 + $0x278] sm:$0xff]
    %v102 = vld [vmem:[%s21 + $0x280] sm:$0xff]
    %v103 = vld [vmem:[%s21 + $0x288] sm:$0xff]
    %v104 = vld [vmem:[%s21 + $0x290] sm:$0xff]
    %v105 = vld [vmem:[%s21 + $0x298] sm:$0xff]
    %v106 = vld [vmem:[%s21 + $0x2a0] sm:$0xff]
    %v107 = vld [vmem:[%s21 + $0x2a8] sm:$0xff]
    %v108 = vld [vmem:[%s21 + $0x2b0] sm:$0xff]
    %v109 = vld [vmem:[%s21 + $0x2b8] sm:$0xff]
    %v110 = vld [vmem:[%s21 + $0x2c0] sm:$0xff]
    %v111 = vld [vmem:[%s21 + $0x2c8] sm:$0xff]
    %v112 = vld [vmem:[%s21 + $0x2d0] sm:$0xff]
    %v113 = vld [vmem:[%s21 + $0x2d8] sm:$0xff]
    %v114 = vld [vmem:[%s21 + $0x2e0] sm:$0xff]
    %v115 = vld [vmem:[%s21 + $0x2e8] sm:$0xff]
    %v116 = vld [vmem:[%s21 + $0x2f0] sm:$0xff]
    %v117 = vld [vmem:[%s21 + $0x2f8] sm:$0xff]
    %v119 = vlaneseq
    %v120 = vshrl.u32 %v119, 7
    %v121 = vsub.s32 0, %v120
    %v122 = vrot.slane %v16, %v121
    %v123 = vlaneseq
    %v124 = vshrl.u32 %v123, 7
    %v125 = vsub.s32 1, %v124
    %v126 = vrot.slane %v16, %v125
    %vm128 = vcmask 261120
    %v129 = vsel %vm128, %v126, 0
    %v132 = vsel %vm128, %v23, 0
    %v135 = vsel %vm128, %v25, 0
    %v138 = vsel %vm128, %v27, 0
    %v141 = vsel %vm128, %v29, 0
    %v144 = vsel %vm128, %v31, 0
    %v147 = vsel %vm128, %v33, 0
    %v150 = vsel %vm128, %v35, 0
    %v153 = vsel %vm128, %v37, 0
    %v156 = vsel %vm128, %v39, 0
    %v159 = vsel %vm128, %v41, 0
    %v162 = vsel %vm128, %v43, 0
    %v165 = vsel %vm128, %v45, 0
    %v168 = vsel %vm128, %v47, 0
    %v171 = vsel %vm128, %v49, 0
    %v174 = vsel %vm128, %v51, 0
    %v177 = vsel %vm128, %v53, 0
    %v180 = vsel %vm128, %v55, 0
    %v183 = vsel %vm128, %v57, 0
    %v186 = vsel %vm128, %v59, 0
    %v189 = vsel %vm128, %v61, 0
    %v192 = vsel %vm128, %v63, 0
    %v195 = vsel %vm128, %v65, 0
    %v198 = vsel %vm128, %v67, 0
    %v201 = vsel %vm128, %v69, 0
    %v204 = vsel %vm128, %v71, 0
    %v207 = vsel %vm128, %v73, 0
    %v210 = vsel %vm128, %v75, 0
    %v213 = vsel %vm128, %v77, 0
    %v216 = vsel %vm128, %v79, 0
    %v219 = vsel %vm128, %v81, 0
    %v222 = vsel %vm128, %v83, 0
    %v225 = vsel %vm128, %v85, 0
    %v228 = vsel %vm128, %v87, 0
    %v231 = vsel %vm128, %v89, 0
    %v234 = vsel %vm128, %v91, 0
    %v237 = vsel %vm128, %v93, 0
    %v240 = vsel %vm128, %v95, 0
    %v243 = vsel %vm128, %v97, 0
    %v246 = vsel %vm128, %v99, 0
    %v249 = vsel %vm128, %v101, 0
    %v252 = vsel %vm128, %v103, 0
    %v255 = vsel %vm128, %v105, 0
    %v258 = vsel %vm128, %v107, 0
    %v261 = vsel %vm128, %v109, 0
    %v264 = vsel %vm128, %v111, 0
    %v267 = vsel %vm128, %v113, 0
    %v270 = vsel %vm128, %v115, 0
    %v273 = vsel %vm128, %v117, 0
    %275 = vmatprep.subr.mxu0 %v132
    %276 = vmatpush1.xpose.msra.mxu0 %v22
    %277 = vmatprep.subr.mxu0 %v135
    %278 = vmatpush1.xpose.msra.mxu0 %v24
    %279 = vmatprep.subr.mxu0 %v138
    %280 = vmatpush1.xpose.msra.mxu0 %v26
    %281 = vmatprep.subr.mxu0 %v141
    %282 = vmatpush1.xpose.msra.mxu0 %v28
    %283 = vmatprep.subr.mxu0 %v144
    %284 = vmatpush1.xpose.msra.mxu0 %v30
    %285 = vmatprep.subr.mxu0 %v147
    %286 = vmatpush1.xpose.msra.mxu0 %v32
    %287 = vmatprep.subr.mxu0 %v150
    %288 = vmatpush1.xpose.msra.mxu0 %v34
    %289 = vmatprep.subr.mxu0 %v153
    %290 = vmatpush1.xpose.msra.mxu0 %v36
    %291 = vmatprep.subr.mxu0 %v156
    %292 = vmatpush1.xpose.msra.mxu0 %v38
    %293 = vmatprep.subr.mxu0 %v159
    %294 = vmatpush1.xpose.msra.mxu0 %v40
    %295 = vmatprep.subr.mxu0 %v162
    %296 = vmatpush1.xpose.msra.mxu0 %v42
    %297 = vmatprep.subr.mxu0 %v165
    %298 = vmatpush1.xpose.msra.mxu0 %v44
    %299 = vmatprep.subr.mxu0 %v168
    %300 = vmatpush1.xpose.msra.mxu0 %v46
    %301 = vmatprep.subr.mxu0 %v171
    %302 = vmatpush1.xpose.msra.mxu0 %v48
    %303 = vmatprep.subr.mxu0 %v174
    %304 = vmatpush1.xpose.msra.mxu0 %v50
    %305 = vmatprep.subr.mxu0 %v177
    %306 = vmatpush1.xpose.msra.mxu0 %v52
    %307 = vmatprep.subr.mxu0 %v180
    %308 = vmatpush1.xpose.msra.mxu0 %v54
    %309 = vmatprep.subr.mxu0 %v183
    %310 = vmatpush1.xpose.msra.mxu0 %v56
    %311 = vmatprep.subr.mxu0 %v186
    %312 = vmatpush1.xpose.msra.mxu0 %v58
    %313 = vmatprep.subr.mxu0 %v189
    %314 = vmatpush1.xpose.msra.mxu0 %v60
    %315 = vmatprep.subr.mxu0 %v192
    %316 = vmatpush1.xpose.msra.mxu0 %v62
    %317 = vmatprep.subr.mxu0 %v195
    %318 = vmatpush1.xpose.msra.mxu0 %v64
    %319 = vmatprep.subr.mxu0 %v198
    %320 = vmatpush1.xpose.msra.mxu0 %v66
    %321 = vmatprep.subr.mxu0 %v201
    %322 = vmatpush1.xpose.msra.mxu0 %v68
    %323 = vmatprep.subr.mxu0 %v204
    %324 = vmatpush1.xpose.msra.mxu0 %v70
    %325 = vmatprep.subr.mxu0 %v207
    %326 = vmatpush1.xpose.msra.mxu0 %v72
    %327 = vmatprep.subr.mxu0 %v210
    %328 = vmatpush1.xpose.msra.mxu0 %v74
    %329 = vmatprep.subr.mxu0 %v213
    %330 = vmatpush1.xpose.msra.mxu0 %v76
    %331 = vmatprep.subr.mxu0 %v216
    %332 = vmatpush1.xpose.msra.mxu0 %v78
    %333 = vmatprep.subr.mxu0 %v219
    %334 = vmatpush1.xpose.msra.mxu0 %v80
    %335 = vmatprep.subr.mxu0 %v222
    %336 = vmatpush1.xpose.msra.mxu0 %v82
    %337 = vmatprep.subr.mxu0 %v225
    %338 = vmatpush1.xpose.msra.mxu0 %v84
    %339 = vmatprep.mubr.f32.mxu0 %v129
    %340 = vmatmul.mubr.f32.gmra.mrb[0].mxu0 %v122
    %v341 = vpop.f32.mrb[0].mxu0
    %v342 = vadd.f32 %v18, %v341
    %v343 = vpop.f32.mrb[0].mxu0
    %v344 = vadd.f32 %v18, %v343
    %345 = vdwg.mxu0
    %346 = vmatprep.subr.mxu0 %v228
    %347 = vmatpush1.xpose.msra.mxu0 %v86
    %348 = vmatprep.subr.mxu0 %v231
    %349 = vmatpush1.xpose.msra.mxu0 %v88
    %350 = vmatprep.subr.mxu0 %v234
    %351 = vmatpush1.xpose.msra.mxu0 %v90
    %352 = vmatprep.subr.mxu0 %v237
    %353 = vmatpush1.xpose.msra.mxu0 %v92
    %354 = vmatprep.subr.mxu0 %v240
    %355 = vmatpush1.xpose.msra.mxu0 %v94
    %356 = vmatprep.subr.mxu0 %v243
    %357 = vmatpush1.xpose.msra.mxu0 %v96
    %358 = vmatprep.subr.mxu0 %v246
    %359 = vmatpush1.xpose.msra.mxu0 %v98
    %360 = vmatprep.subr.mxu0 %v249
    %361 = vmatpush1.xpose.msra.mxu0 %v100
    %362 = vmatprep.subr.mxu0 %v252
    %363 = vmatpush1.xpose.msra.mxu0 %v102
    %364 = vmatprep.subr.mxu0 %v255
    %365 = vmatpush1.xpose.msra.mxu0 %v104
    %366 = vmatprep.subr.mxu0 %v258
    %367 = vmatpush1.xpose.msra.mxu0 %v106
    %368 = vmatprep.subr.mxu0 %v261
    %369 = vmatpush1.xpose.msra.mxu0 %v108
    %370 = vmatprep.subr.mxu0 %v264
    %371 = vmatpush1.xpose.msra.mxu0 %v110
    %372 = vmatprep.subr.mxu0 %v267
    %373 = vmatpush1.xpose.msra.mxu0 %v112
    %374 = vmatprep.subr.mxu0 %v270
    %375 = vmatpush1.xpose.msra.mxu0 %v114
    %376 = vmatprep.subr.mxu0 %v273
    %377 = vmatpush1.xpose.msra.mxu0 %v116
    %378 = vmatprep.subr.mxu0 0.0
    %379 = vmatpush1.xpose.msra.mxu0 0.0
    %380 = vmatprep.subr.mxu0 0.0
    %381 = vmatpush1.xpose.msra.mxu0 0.0
    %382 = vmatprep.subr.mxu0 0.0
    %383 = vmatpush1.xpose.msra.mxu0 0.0
    %384 = vmatprep.subr.mxu0 0.0
    %385 = vmatpush1.xpose.msra.mxu0 0.0
    %386 = vmatprep.subr.mxu0 0.0
    %387 = vmatpush1.xpose.msra.mxu0 0.0
    %388 = vmatprep.subr.mxu0 0.0
    %389 = vmatpush1.xpose.msra.mxu0 0.0
    %390 = vmatprep.subr.mxu0 0.0
    %391 = vmatpush1.xpose.msra.mxu0 0.0
    %392 = vmatprep.subr.mxu0 0.0
    %393 = vmatpush1.xpose.msra.mxu0 0.0
    %394 = vmatprep.subr.mxu0 0.0
    %395 = vmatpush1.xpose.msra.mxu0 0.0
    %396 = vmatprep.subr.mxu0 0.0
    %397 = vmatpush1.xpose.msra.mxu0 0.0
    %398 = vmatprep.subr.mxu0 0.0
    %399 = vmatpush1.xpose.msra.mxu0 0.0
    %400 = vmatprep.subr.mxu0 0.0
    %401 = vmatpush1.xpose.msra.mxu0 0.0
    %402 = vmatprep.subr.mxu0 0.0
    %403 = vmatpush1.xpose.msra.mxu0 0.0
    %404 = vmatprep.subr.mxu0 0.0
    %405 = vmatpush1.xpose.msra.mxu0 0.0
    %406 = vmatprep.subr.mxu0 0.0
    %407 = vmatpush1.xpose.msra.mxu0 0.0
    %408 = vmatprep.subr.mxu0 0.0
    %409 = vmatpush1.xpose.msra.mxu0 0.0
    %410 = vmatprep.mubr.f32.mxu0 %v129
    %411 = vmatmul.mubr.f32.gmra.mrb[0].mxu0 %v122
    %v412 = vpop.f32.mrb[0].mxu0
    %v413 = vadd.f32 %v18, %v412
    %v414 = vpop.f32.mrb[0].mxu0
    %415 = vdwg.mxu0
    %v419 = vcombine.low %v342, %v344
    %v421 = vunpack.c.l.s4 1966171168
    %v422 = vunpack.c.0.s8 %v421
    %v423 = vlaneseq
    %v424 = vshrl.u32 %v423, 7
    %v425 = vsub.s32 %v422, %v424
    %v426 = vrot.slane %v419, %v425
    %v428 = vunpack.c.l.s4 1966171168
    %v429 = vunpack.c.0.s8 %v428
    %v430 = vlaneseq
    %v431 = vshrl.u32 %v430, 7
    %v432 = vsub.s32 %v429, %v431
    %v433 = vrot.slane %v413, %v432
    %v434 = vcombine.low %v426, %v433
    %v436 = vunpack.c.l.s4 1966171168
    %v437 = vunpack.c.0.s8 %v436
    %v438 = vlaneseq
    %v439 = vshrl.u32 %v438, 7
    %v440 = vsub.s32 %v437, %v439
    %v441 = vrot.slane %v434, %v440
    %v443 = vlaneseq
    %vm444 = vcmp.ge.s32.totalorder %v443, 0
    %vm445 = vcmp.lt.s32.totalorder %v443, 384
    %vm446 = vmand %vm444, %vm445
    %447 = vst.msk [vmem:[#allocation3] sm:$0x7] %vm446, %v441
    // Predicated region
    $region14: #{tpu_custom_call.1} parent=1 // pred_check
      _
    $region15: #{tpu_custom_call.1} parent=1 // pred_check_branch
      %449 = sbr.rel (0) target = $region17
    $region16: #{tpu_custom_call.1} parent=1 // pred_region
      %s451 = ssub.s32 48, 48
      %452 = vsyncadd [#allocation4], %s451
      %s454 = sshll.u32 [#allocation3], 4
      %s455 = int_to_ptr.vmem [resolvable:$true] %s454
      %457 = dma.vmem_to_hbm [thread:$0]  %s455, 48, %s3, [#allocation4]
    $region17: #{tpu_custom_call.1} parent=1 // pred_fallthru
      _
    // Predicated region
    $region18: #{tpu_custom_call.1} parent=1 // pred_check
      _
    $region19: #{tpu_custom_call.1} parent=1 // pred_check_branch
      %459 = sbr.rel (0) target = $region21
    $region20: #{tpu_custom_call.1} parent=1 // pred_region
      %460 = dma.done [#allocation4], 48
    $region21: #{tpu_custom_call.1} parent=1 // pred_fallthru
      _
    %461 = vsyncpa [#allocation4], 1

</llo_original>
